<compile_context>
chip_gen: v7x
topology: tpu7x:2x2x1
jax: 0.10.0
libtpu: 0.0.40
codegen_flags: <defaults>
</compile_context>

<pallas_src>
import jax
import jax.numpy as jnp
from jax.experimental import pallas as pl
from jax.experimental.pallas import tpu as pltpu


def _make_kernel(N, tm, has_mask, mask_is_elementwise, has_mask_pos, needs_row_mask):
    def kernel(*refs):
        it = iter(refs)
        inp_ref = next(it)
        tgt_ref = next(it)
        m_ref = next(it) if has_mask else None
        mp_ref = next(it) if has_mask_pos else None
        loss_ref = next(it)
        msum_ref = next(it) if has_mask else None

        x = inp_ref[...].astype(jnp.float32)
        t = tgt_ref[...].astype(jnp.float32)
        if has_mask_pos:
            t = t + mp_ref[...].astype(jnp.float32)

        # -log_softmax(x) pieces: x_sh is needed for exp anyway; log_z is (tm,1).
        x_max = jnp.max(x, axis=1, keepdims=True)
        x_sh = x - x_max
        log_z = jnp.log(jnp.sum(jnp.exp(x_sh), axis=1, keepdims=True))      # (tm,1)

        # softmax(t) pieces, unnormalized; normalization folded into a per-row
        # reciprocal instead of a full-tile multiply.
        t_max = jnp.max(t, axis=1, keepdims=True)
        t_exp = jnp.exp(t - t_max)                                           # (tm,C)
        z_t = jnp.sum(t_exp, axis=1, keepdims=True)                          # (tm,1)
        inv_zt = pl.reciprocal(z_t)                                          # exact; (tm,1) is free

        row_msum = None
        if has_mask and mask_is_elementwise:
            m = m_ref[...].astype(jnp.float32)                               # (tm,C)
            t_exp_m = t_exp * m
            s1 = jnp.sum(t_exp_m, axis=1, keepdims=True)
            s2 = jnp.sum(t_exp_m * x_sh, axis=1, keepdims=True)
            row_loss = (log_z * s1 - s2) * inv_zt                            # (tm,1)
            row_msum = jnp.sum(m, axis=1, keepdims=True)                     # (tm,1)
        else:
            s2 = jnp.sum(t_exp * x_sh, axis=1, keepdims=True)
            row_loss = log_z - s2 * inv_zt                                   # (tm,1)
            if has_mask:                                                     # row mask, (tm,1)
                m = m_ref[...].astype(jnp.float32)
                row_loss = row_loss * m
                row_msum = m

        if needs_row_mask:
            # Emitted only when N % tm != 0.  Padded-row garbage stays confined
            # to the padded rows' own per-row scalars (every reduction above is
            # per-row), so a single cheap (tm,1) select is sufficient.
            rows = jax.lax.broadcasted_iota(jnp.int32, (tm, 1), 0) + pl.program_id(0) * tm
            valid = rows < N
            row_loss = jnp.where(valid, row_loss, 0.0)
            if has_mask:
                row_msum = jnp.where(valid, row_msum, 0.0)

        loss_ref[...] = jnp.zeros((1, 8, 128), jnp.float32) + jnp.sum(row_loss)
        if has_mask:
            msum_ref[...] = jnp.zeros((1, 8, 128), jnp.float32) + jnp.sum(row_msum)

    return kernel


def _round_up(x, m):
    return -(-x // m) * m


def _vmem_budget():
    """(vmem_limit_bytes, tile_budget_bytes) from the chip's physical VMEM."""
    phys = 64 * 1024 * 1024  # conservative default = v7x per-core VMEM
    try:
        info = pltpu.get_tpu_info()
        cap = int(getattr(info, "vmem_capacity_bytes", 0) or 0)
        if cap > 0:
            phys = cap
    except Exception:
        pass
    vmem_limit = min((phys * 3) // 4, 96 * 1024 * 1024)  # 48 MiB on v7x, 96 MiB on v5e/v6e
    tile_budget = vmem_limit // 2                         # streamed tiles + f32 intermediates
    return int(vmem_limit), int(tile_budget)


def _pick_tm(N, C, streams, n_intermediates, tile_budget):
    """streams: list of (itemsize_bytes, ncols) for every HBM-streamed input."""
    # bf16 packs 16 sublanes per vreg: round to 16-row blocks when streaming it.
    gran = 16 if any(isz < 4 for isz, _ in streams) else 8
    bytes_per_row = sum(2 * cols * isz for isz, cols in streams) + n_intermediates * C * 4
    tm = tile_budget // max(bytes_per_row, 1)
    tm = max(gran, min(4096, (tm // gran) * gran))
    # Keep >= 2 grid tiles so both v7x TensorCores get work (harmless on 1-TC chips).
    tm = min(tm, max(_round_up(-(-N // 2), gran), gran))
    tm = min(tm, _round_up(N, gran))  # never larger than the (padded) batch
    return max(tm, gran)


def soft_cross_entropy(input_logits, target_logits, mask=None, mask_pos=None, tm=None):
    """Pallas TPU implementation of SoftCrossEntropy.forward."""
    input_logits = jnp.asarray(input_logits)
    target_logits = jnp.asarray(target_logits)
    N, C = input_logits.shape
    has_mask = mask is not None
    has_mask_pos = mask_pos is not None

    operands = [input_logits, target_logits]
    streams = [(input_logits.dtype.itemsize, C), (target_logits.dtype.itemsize, C)]

    mask_cols = None
    mask_is_elementwise = False
    mask_sum_in_kernel = False
    wrapper_mask_sum = None
    if has_mask:
        mask_arr = jnp.asarray(mask)
        if not jnp.issubdtype(mask_arr.dtype, jnp.floating):
            mask_arr = mask_arr.astype(jnp.float32)
        if mask_arr.ndim == 1 and mask_arr.shape[0] == N:
            # Per-sample mask: treated as a (N, 1) row mask (the common usage).
            mask_arr = mask_arr.reshape(N, 1)
        if mask_arr.shape in ((N, C), (N, 1)):
            mask_sum_in_kernel = True
        else:
            # Uncommon broadcast shape: keep torch.sum(mask) semantics for the
            # denominator; broadcast only for the numerator stream.
            wrapper_mask_sum = jnp.sum(mask_arr.astype(jnp.float32))
            mask_arr = jnp.broadcast_to(mask_arr, (N, C))
        mask_cols = mask_arr.shape[1]
        mask_is_elementwise = mask_cols != 1
        operands.append(mask_arr)
        streams.append((mask_arr.dtype.itemsize, mask_cols))

    if has_mask_pos:
        mp_arr = jnp.asarray(mask_pos)
        if mp_arr.shape != (N, C):
            mp_arr = jnp.broadcast_to(mp_arr, (N, C))
        operands.append(mp_arr)
        streams.append((mp_arr.dtype.itemsize, C))

    vmem_limit, tile_budget = _vmem_budget()
    # Live f32 (tm, C) intermediates: x, x_sh, exp(x_sh), t, t_exp, product,
    # plus the f32 upcasts of an elementwise mask / mask_pos when present.
    n_int = 6 + (1 if (has_mask and mask_is_elementwise) else 0) + (1 if has_mask_pos else 0)
    if tm is None:
        tm = _pick_tm(N, C, streams, n_int, tile_budget)
    num_tiles = pl.cdiv(N, tm)
    needs_row_mask = (N % tm) != 0

    in_specs = [pl.BlockSpec((tm, C), lambda i: (i, 0)),
                pl.BlockSpec((tm, C), lambda i: (i, 0))]
    if has_mask:
        in_specs.append(pl.BlockSpec((tm, mask_cols), lambda i: (i, 0)))
    if has_mask_pos:
        in_specs.append(pl.BlockSpec((tm, C), lambda i: (i, 0)))

    part_shape = jax.ShapeDtypeStruct((num_tiles, 8, 128), jnp.float32)
    part_spec = pl.BlockSpec((1, 8, 128), lambda i: (i, 0, 0))
    out_shape = [part_shape, part_shape] if has_mask else [part_shape]
    out_specs = [part_spec, part_spec] if has_mask else [part_spec]

    outs = pl.pallas_call(
        _make_kernel(N, tm, has_mask, mask_is_elementwise, has_mask_pos, needs_row_mask),
        out_shape=out_shape,
        grid_spec=pltpu.PrefetchScalarGridSpec(
            num_scalar_prefetch=0,
            grid=(num_tiles,),
            in_specs=in_specs,
            out_specs=out_specs,
        ),
        compiler_params=pltpu.CompilerParams(
            dimension_semantics=("parallel",),
            vmem_limit_bytes=vmem_limit,
        ),
    )(*operands)

    total = jnp.sum(outs[0][:, 0, 0])
    if not has_mask:
        sample_num = jnp.float32(N)
    elif mask_sum_in_kernel:
        sample_num = jnp.sum(outs[1][:, 0, 0])
    else:
        sample_num = wrapper_mask_sum
    return total / sample_num


def _reference(input_logits, target_logits, mask=None, mask_pos=None):
    # pure-JAX reference for validation (computed in f32, like the kernel)
    x = jnp.asarray(input_logits, jnp.float32)
    t = jnp.asarray(target_logits, jnp.float32)
    if mask_pos is not None:
        t = t + jnp.asarray(mask_pos, jnp.float32)
    ll = -jax.nn.log_softmax(x, axis=1)
    sm = jax.nn.softmax(t, axis=1)
    if mask is None:
        return jnp.sum(ll * sm) / x.shape[0]
    m = jnp.asarray(mask, jnp.float32)
    m2 = m.reshape(x.shape[0], 1) if m.ndim == 1 else m
    return jnp.sum(ll * sm * m2) / jnp.sum(m)


if __name__ == "__main__":
    key = jax.random.PRNGKey(0)
    k1, k2, k3, k4, k5 = jax.random.split(key, 5)

    # Small shapes; N deliberately not a multiple of the tile size to exercise
    # the remainder-row (per-row scalar) masking path, and >= 2 grid tiles.
    N, C = 20, 128
    x = jax.random.normal(k1, (N, C), jnp.float32)
    t = jax.random.normal(k2, (N, C), jnp.float32)
    mask_el = (jax.random.uniform(k3, (N, C)) > 0.5).astype(jnp.float32)
    mask_row = (jax.random.uniform(k5, (N,)) > 0.3).astype(jnp.float32)
    mask_pos = 0.1 * jax.random.normal(k4, (N, C), jnp.float32)

    # Case 1: no mask, no mask_pos (only 2 streamed arrays).
    l0 = soft_cross_entropy(x, t)
    jax.block_until_ready(l0)
    r0 = _reference(x, t)
    assert jnp.allclose(l0, r0, rtol=1e-5, atol=1e-5), (l0, r0)

    # Case 2: elementwise mask + mask_pos, both fused into the kernel.
    l1 = soft_cross_entropy(x, t, mask=mask_el, mask_pos=mask_pos)
    jax.block_until_ready(l1)
    r1 = _reference(x, t, mask=mask_el, mask_pos=mask_pos)
    assert jnp.allclose(l1, r1, rtol=1e-5, atol=1e-5), (l1, r1)

    # Case 3: bf16 logits streamed natively + per-row (N,) mask as a (tm, 1) block.
    xb = x.astype(jnp.bfloat16)
    tb = t.astype(jnp.bfloat16)
    l2 = soft_cross_entropy(xb, tb, mask=mask_row)
    jax.block_until_ready(l2)
    r2 = _reference(xb, tb, mask=mask_row)
    assert jnp.allclose(l2, r2, rtol=1e-4, atol=1e-5), (l2, r2)

    print("KERNEL_OK")
</pallas_src>

<mosaic_0001>
module attributes {stable_mosaic.version = 11 : i64} {
  func.func @kernel(%arg0: i32, %arg1: memref<16x128xf32, #tpu.memory_space<vmem>>, %arg2: memref<16x128xf32, #tpu.memory_space<vmem>>, %arg3: memref<1x8x128xf32, #tpu.memory_space<vmem>>) attributes {dimension_semantics = [#tpu.dimension_semantics<parallel>], iteration_bounds = array<i64: 2>, scalar_prefetch = 0 : i64, scratch_operands = 0 : i64, tpu.core_type = #tpu.core_type<tc>, window_params = [{transform_indices = @transform_0, window_bounds = array<i64: 16, 128>}, {transform_indices = @transform_1, window_bounds = array<i64: 16, 128>}, {transform_indices = @transform_2, window_bounds = array<i64: 1, 8, 128>}]} {
    %c0 = arith.constant 0 : index
    %c0_0 = arith.constant 0 : index
    %0 = vector.load %arg1[%c0, %c0_0] : memref<16x128xf32, #tpu.memory_space<vmem>>, vector<16x128xf32>
    %c0_1 = arith.constant 0 : index
    %c0_2 = arith.constant 0 : index
    %1 = vector.load %arg2[%c0_1, %c0_2] : memref<16x128xf32, #tpu.memory_space<vmem>>, vector<16x128xf32>
    %cst = arith.constant dense<0xFF800000> : vector<16xf32>
    %2 = vector.multi_reduction <maximumf>, %0, %cst [1] : vector<16x128xf32> to vector<16xf32>
    %3 = vector.shape_cast %2 : vector<16xf32> to vector<16x1xf32>
    %4 = vector.broadcast %3 : vector<16x1xf32> to vector<16x128xf32>
    %5 = arith.subf %0, %4 : vector<16x128xf32>
    %6 = math.exp %5 : vector<16x128xf32>
    %cst_3 = arith.constant dense<0.000000e+00> : vector<16xf32>
    %7 = vector.multi_reduction <add>, %6, %cst_3 [1] : vector<16x128xf32> to vector<16xf32>
    %8 = vector.shape_cast %7 : vector<16xf32> to vector<16x1xf32>
    %9 = math.log %8 : vector<16x1xf32>
    %cst_4 = arith.constant dense<0xFF800000> : vector<16xf32>
    %10 = vector.multi_reduction <maximumf>, %1, %cst_4 [1] : vector<16x128xf32> to vector<16xf32>
    %11 = vector.shape_cast %10 : vector<16xf32> to vector<16x1xf32>
    %12 = vector.broadcast %11 : vector<16x1xf32> to vector<16x128xf32>
    %13 = arith.subf %1, %12 : vector<16x128xf32>
    %14 = math.exp %13 : vector<16x128xf32>
    %cst_5 = arith.constant dense<0.000000e+00> : vector<16xf32>
    %15 = vector.multi_reduction <add>, %14, %cst_5 [1] : vector<16x128xf32> to vector<16xf32>
    %16 = vector.shape_cast %15 : vector<16xf32> to vector<16x1xf32>
    %17 = tpu.reciprocal %16 : vector<16x1xf32> -> vector<16x1xf32>
    %18 = arith.mulf %14, %5 : vector<16x128xf32>
    %cst_6 = arith.constant dense<0.000000e+00> : vector<16xf32>
    %19 = vector.multi_reduction <add>, %18, %cst_6 [1] : vector<16x128xf32> to vector<16xf32>
    %20 = vector.shape_cast %19 : vector<16xf32> to vector<16x1xf32>
    %21 = arith.mulf %20, %17 : vector<16x1xf32>
    %22 = arith.subf %9, %21 : vector<16x1xf32>
    %23 = tpu.iota {dimensions = array<i32: 0>} : vector<16x1xi32>
    %c16_i32 = arith.constant 16 : i32
    %24 = arith.muli %arg0, %c16_i32 : i32
    %25 = vector.broadcast %24 : i32 to vector<16x1xi32>
    %26 = arith.addi %23, %25 : vector<16x1xi32>
    %c20_i32 = arith.constant 20 : i32
    %27 = vector.broadcast %c20_i32 : i32 to vector<16x1xi32>
    %28 = arith.cmpi slt, %26, %27 : vector<16x1xi32>
    %cst_7 = arith.constant 0.000000e+00 : f32
    %29 = vector.broadcast %cst_7 : f32 to vector<16x1xf32>
    %30 = arith.select %28, %22, %29 : vector<16x1xi1>, vector<16x1xf32>
    %cst_8 = arith.constant 0.000000e+00 : f32
    %31 = vector.broadcast %cst_8 : f32 to vector<1x8x128xf32>
    %32 = vector.shape_cast %30 : vector<16x1xf32> to vector<1x16x1xf32>
    %cst_9 = arith.constant dense<0.000000e+00> : vector<1xf32>
    %33 = vector.multi_reduction <add>, %32, %cst_9 [1, 2] : vector<1x16x1xf32> to vector<1xf32>
    %34 = vector.shape_cast %33 : vector<1xf32> to vector<1x1x1xf32>
    %35 = vector.extract %34[0, 0, 0] : f32 from vector<1x1x1xf32>
    %36 = vector.broadcast %35 : f32 to vector<1x8x128xf32>
    %37 = arith.addf %31, %36 : vector<1x8x128xf32>
    %c0_10 = arith.constant 0 : index
    %c0_11 = arith.constant 0 : index
    %c0_12 = arith.constant 0 : index
    %38 = vector.load %arg3[%c0_10, %c0_11, %c0_12] : memref<1x8x128xf32, #tpu.memory_space<vmem>>, vector<1x8x128xf32>
    tpu.vector_store %arg3[%c0_10, %c0_11, %c0_12], %37 {strides = array<i32>} : memref<1x8x128xf32, #tpu.memory_space<vmem>>, vector<1x8x128xf32>,
    return
  }
  func.func @transform_0(%arg0: i32) -> (i32, i32) {
    %c0_i32 = arith.constant 0 : i32
    %c0_i32_0 = arith.constant 0 : i32
    return %arg0, %c0_i32 : i32, i32
  }
  func.func @transform_1(%arg0: i32) -> (i32, i32) {
    %c0_i32 = arith.constant 0 : i32
    %c0_i32_0 = arith.constant 0 : i32
    return %arg0, %c0_i32 : i32, i32
  }
  func.func @transform_2(%arg0: i32) -> (i32, i32, i32) {
    %c0_i32 = arith.constant 0 : i32
    %c0_i32_0 = arith.constant 0 : i32
    %c0_i32_1 = arith.constant 0 : i32
    return %arg0, %c0_i32, %c0_i32_0 : i32, i32, i32
  }
}

</mosaic_0001>

<llo_original>
// kernel: tpu_custom_call.1
$region0: #{tpu_custom_call.1}
  #allocation0 [shape = 'u32[]', space=smem, size = 0x4, offset = 0x4, fixed_abs, tag = 'smem constant byte address 0x4 - core index']
  #allocation1 [shape = 'u32[144,128]{1,0:T(1,128)}', space=vmem, size = 0x12000, scoped, tag = 'internal scratch']
  %s0 = inlined_call_operand.hbm [shape: f32[20,128], index: 0, kind: input, shape index: {}]
  %s1 = inlined_call_operand.hbm [shape: f32[20,128], index: 1, kind: input, shape index: {}]
  %s2 = inlined_call_operand.hbm [shape: f32[2,8,128], index: 2, kind: output, shape index: {}]
  %s3 = sld [smem:[#allocation0]]
  $region49: #{tpu_custom_call.1} parent=0
    _
  %s5 = ssub.s32 1, %s3
  %s6 = scalar_select 0, %s5, %s3
  $region1: #{tpu_custom_call.1} parent=0
    #allocation2 [shape = 'u8[16384]{0}', space=vmem, size = 0x4000, scoped, tag = 'input window, operand 0']
    #allocation3 [shape = 's32[2]{0}', space=sflag, size = 0x8, scoped, tag = 'scoped memory for tpu_custom_call.1']
    #allocation4 [shape = 's32[2]{0}', space=sflag, size = 0x8, scoped, tag = 'scoped memory for tpu_custom_call.1']
    #allocation5 [shape = 'u8[16384]{0}', space=vmem, size = 0x4000, scoped, tag = 'input window, operand 1']
    #allocation6 [shape = 's32[2]{0}', space=sflag, size = 0x8, scoped, tag = 'scoped memory for tpu_custom_call.1']
    #allocation7 [shape = 'u8[8192]{0}', space=vmem, size = 0x2000, scoped, tag = 'output window, operand 0']
    %7 = vsyncpa [#allocation3], 0
    %s8 = scalar_lea.sflag [#allocation3], 1
    %9 = vsyncpa %s8, 0
    %10 = vsyncpa [#allocation6], 0
    %s11 = scalar_lea.sflag [#allocation6], 1
    %12 = vsyncpa %s11, 0
    %13 = vsyncpa [#allocation4], 0
    %s14 = scalar_lea.sflag [#allocation4], 1
    %15 = vsyncpa %s14, 0
    loop: start=0, step=1, limit=4
    $region2: #{tpu_custom_call.1} parent=1 // loop_pre_header
      _
    $region3: #{tpu_custom_call.1} parent=1 // loop_header
      %s17 = sphi 0, %s21
      %p18 = scmp.ge.s32.totalorder %s17, 4
      %s27 = sphi 0, %s29
      %s30 = sphi 0, %s27
      %s31 = sphi 0, %s30
      %s47 = sphi 0, %s31
      %s53 = sphi 0, %s55
      %s56 = sphi 0, %s53
      %s57 = sphi 0, %s56
      %s73 = sphi 0, %s57
      %s79 = sphi 0, %s81
      %s82 = sphi 0, %s79
      %s83 = sphi 0, %s82
      %s99 = sphi 0, %s83
    $region4: #{tpu_custom_call.1} parent=1 // loop_header_branch
      %20 = sbr.rel (%p18) target = $region8
    $region5: #{tpu_custom_call.1} parent=1 // loop_body
      %s22 = ssub.s32 %s17, 1
      %s23 = ssub.s32 %s17, 2
      %s24 = sadd.s32 %s17, 1
      %s25 = ssub.s32 %s17, %s24
      %p26 = scmp.eq.s32.totalorder %s25, 0
      %s28 = sadd.s32 %s27, 1
      %s29 = scalar_select %p26, %s27, %s28
      %p32 = pneg %p26
      %p33 = scmp.eq.s32.totalorder %s17, 1
      %p34 = por %p32, %p33
      %p35 = scmp.ne.s32.totalorder %s27, %s30
      %p36 = scmp.eq.s32.totalorder %s17, 0
      %p37 = por %p35, %p36
      %p38 = scmp.ne.s32.totalorder %s27, %s30
      %p39 = scmp.eq.s32.totalorder %s22, 1
      %p40 = por %p38, %p39
      %p41 = scmp.ne.s32.totalorder %s30, %s31
      %p42 = scmp.eq.s32.totalorder %s22, 0
      %p43 = por %p41, %p42
      %p44 = scmp.ne.s32.totalorder %s30, %s31
      %p45 = scmp.eq.s32.totalorder %s23, 1
      %p46 = por %p44, %p45
      %p48 = scmp.ne.s32.totalorder %s31, %s47
      %p49 = scmp.eq.s32.totalorder %s23, 0
      %p50 = por %p48, %p49
      %s51 = ssub.s32 %s17, %s24
      %p52 = scmp.eq.s32.totalorder %s51, 0
      %s54 = sadd.s32 %s53, 1
      %s55 = scalar_select %p52, %s53, %s54
      %p58 = pneg %p52
      %p59 = scmp.eq.s32.totalorder %s17, 1
      %p60 = por %p58, %p59
      %p61 = scmp.ne.s32.totalorder %s53, %s56
      %p62 = scmp.eq.s32.totalorder %s17, 0
      %p63 = por %p61, %p62
      %p64 = scmp.ne.s32.totalorder %s53, %s56
      %p65 = scmp.eq.s32.totalorder %s22, 1
      %p66 = por %p64, %p65
      %p67 = scmp.ne.s32.totalorder %s56, %s57
      %p68 = scmp.eq.s32.totalorder %s22, 0
      %p69 = por %p67, %p68
      %p70 = scmp.ne.s32.totalorder %s56, %s57
      %p71 = scmp.eq.s32.totalorder %s23, 1
      %p72 = por %p70, %p71
      %p74 = scmp.ne.s32.totalorder %s57, %s73
      %p75 = scmp.eq.s32.totalorder %s23, 0
      %p76 = por %p74, %p75
      %s77 = ssub.s32 %s17, %s24
      %p78 = scmp.eq.s32.totalorder %s77, 0
      %s80 = sadd.s32 %s79, 1
      %s81 = scalar_select %p78, %s79, %s80
      %p84 = pneg %p78
      %p85 = scmp.eq.s32.totalorder %s17, 1
      %p86 = por %p84, %p85
      %p87 = scmp.ne.s32.totalorder %s79, %s82
      %p88 = scmp.eq.s32.totalorder %s17, 0
      %p89 = por %p87, %p88
      %p90 = scmp.ne.s32.totalorder %s79, %s82
      %p91 = scmp.eq.s32.totalorder %s22, 1
      %p92 = por %p90, %p91
      %p93 = scmp.ne.s32.totalorder %s82, %s83
      %p94 = scmp.eq.s32.totalorder %s22, 0
      %p95 = por %p93, %p94
      %p96 = scmp.ne.s32.totalorder %s82, %s83
      %p97 = scmp.eq.s32.totalorder %s23, 1
      %p98 = por %p96, %p97
      %p100 = scmp.ne.s32.totalorder %s83, %s99
      %p101 = scmp.eq.s32.totalorder %s23, 0
      %p102 = por %p100, %p101
      %p103 = scmp.le.s32.totalorder 1, %s17
      %p104 = scmp.lt.s32.totalorder %s17, 3
      %p105 = pnand %p103, %p104
      %p106 = pneg %p105
      // Predicated region
      $region9: #{tpu_custom_call.1} parent=5 // pred_check
        _
      $region10: #{tpu_custom_call.1} parent=5 // pred_check_branch
        %108 = sbr.rel (%p105) target = $region12
      $region11: #{tpu_custom_call.1} parent=5 // pred_region
        %s109 = ssub.s32 %s17, 1
      $region12: #{tpu_custom_call.1} parent=5 // pred_fallthru
        _
      %p110 = scmp.lt.s32.totalorder %s17, 2
      // Predicated region
      $region13: #{tpu_custom_call.1} parent=5 // pred_check
        %p111 = pneg %p110
      $region14: #{tpu_custom_call.1} parent=5 // pred_check_branch
        %113 = sbr.rel (%p111) target = $region16
      $region15: #{tpu_custom_call.1} parent=5 // pred_region
        // Predicated region
        $region17: #{tpu_custom_call.1} parent=15 // pred_check
          %p114 = pneg %p37
        $region18: #{tpu_custom_call.1} parent=15 // pred_check_branch
          %116 = sbr.rel (%p114) target = $region20
        $region19: #{tpu_custom_call.1} parent=15 // pred_region
          %s117 = sand.u32 %s27, 1
          %s118 = scalar_lea.sflag [#allocation3], %s117
          %s119 = sand.u32 %s27, 1
          %s120 = smul.addr %s119, 16
          %s121 = scalar_lea.vmem [#allocation2], %s120
          %s122 = smul.u32 2, %s17
          %s123 = ssub.s32 3, %s122
          %p124 = scmp.lt.s32.totalorder %s123, 2
          %s125 = scalar_select %p124, %s123, 2
          %s126 = smul.u32 128, %s125
          %s128 = ssub.s32 256, %s126
          %129 = vsyncadd %s118, %s128
          %p130 = scmp.ne.s32.totalorder 0, %s126
          %s131 = smul.addr %s122, 128
          %s132 = scalar_lea.hbm %s0, %s131
          %s133 = smul.u32 8, %s125
          %s134 = sshll.u32 %s121, 4
          %s135 = int_to_ptr.vmem [resolvable:$true] %s134
          %s136 = sshll.u32 %s133, 4
          %140 = dma.hbm_to_vmem [thread:$0]  (%p130), %s132, %s136, %s135, %s118, 128, 128, 8
        $region20: #{tpu_custom_call.1} parent=15 // pred_fallthru
          _
        // Predicated region
        $region21: #{tpu_custom_call.1} parent=15 // pred_check
          %p141 = pneg %p63
        $region22: #{tpu_custom_call.1} parent=15 // pred_check_branch
          %143 = sbr.rel (%p141) target = $region24
        $region23: #{tpu_custom_call.1} parent=15 // pred_region
          %s144 = sand.u32 %s53, 1
          %s145 = scalar_lea.sflag [#allocation6], %s144
          %s146 = sand.u32 %s53, 1
          %s147 = smul.addr %s146, 16
          %s148 = scalar_lea.vmem [#allocation5], %s147
          %s149 = smul.u32 2, %s17
          %s150 = ssub.s32 3, %s149
          %p151 = scmp.lt.s32.totalorder %s150, 2
          %s152 = scalar_select %p151, %s150, 2
          %s153 = smul.u32 128, %s152
          %s155 = ssub.s32 256, %s153
          %156 = vsyncadd %s145, %s155
          %p157 = scmp.ne.s32.totalorder 0, %s153
          %s158 = smul.addr %s149, 128
          %s159 = scalar_lea.hbm %s1, %s158
          %s160 = smul.u32 8, %s152
          %s161 = sshll.u32 %s148, 4
          %s162 = int_to_ptr.vmem [resolvable:$true] %s161
          %s163 = sshll.u32 %s160, 4
          %167 = dma.hbm_to_vmem [thread:$0]  (%p157), %s159, %s163, %s162, %s145, 128, 128, 8
        $region24: #{tpu_custom_call.1} parent=15 // pred_fallthru
          _
      $region16: #{tpu_custom_call.1} parent=5 // pred_fallthru
        _
      %p168 = scmp.le.s32.totalorder 1, %s17
      %p169 = scmp.lt.s32.totalorder %s17, 3
      %p170 = pnand %p168, %p169
      %p171 = pneg %p170
      // Predicated region
      $region25: #{tpu_custom_call.1} parent=5 // pred_check
        _
      $region26: #{tpu_custom_call.1} parent=5 // pred_check_branch
        %173 = sbr.rel (%p170) target = $region28
      $region27: #{tpu_custom_call.1} parent=5 // pred_region
        %s174 = ssub.s32 %s17, 1
        %s175 = sand.u32 %s30, 1
        %s176 = scalar_lea.sflag [#allocation3], %s175
        %s177 = sand.u32 %s30, 1
        %s178 = smul.addr %s177, 16
        %s179 = scalar_lea.vmem [#allocation2], %s178
        // Predicated region
        $region29: #{tpu_custom_call.1} parent=27 // pred_check
          %p180 = pneg %p43
        $region30: #{tpu_custom_call.1} parent=27 // pred_check_branch
          %182 = sbr.rel (%p180) target = $region32
        $region31: #{tpu_custom_call.1} parent=27 // pred_region
          %183 = dma.done %s176, 256
        $region32: #{tpu_custom_call.1} parent=27 // pred_fallthru
          _
        %s184 = sand.u32 %s56, 1
        %s185 = scalar_lea.sflag [#allocation6], %s184
        %s186 = sand.u32 %s56, 1
        %s187 = smul.addr %s186, 16
        %s188 = scalar_lea.vmem [#allocation5], %s187
        // Predicated region
        $region33: #{tpu_custom_call.1} parent=27 // pred_check
          %p189 = pneg %p69
        $region34: #{tpu_custom_call.1} parent=27 // pred_check_branch
          %191 = sbr.rel (%p189) target = $region36
        $region35: #{tpu_custom_call.1} parent=27 // pred_region
          %192 = dma.done %s185, 256
        $region36: #{tpu_custom_call.1} parent=27 // pred_fallthru
          _
        %s193 = sand.u32 %s30, 1
        %s194 = scalar_lea.sflag [#allocation3], %s193
        %s195 = sand.u32 %s30, 1
        %s196 = smul.addr %s195, 16
        %s197 = scalar_lea.vmem [#allocation2], %s196
        %p198 = pneg %p43
        %p199 = pneg %p40
        %s200 = sand.u32 %s56, 1
        %s201 = scalar_lea.sflag [#allocation6], %s200
        %s202 = sand.u32 %s56, 1
        %s203 = smul.addr %s202, 16
        %s204 = scalar_lea.vmem [#allocation5], %s203
        %p205 = pneg %p69
        %p206 = pneg %p66
        %p207 = pneg %p95
        %p208 = pneg %p92
        %s209 = sand.u32 %s82, 1
        %s210 = scalar_lea.sflag [#allocation4], %s209
        %s211 = sand.u32 %s82, 1
        %s212 = smul.addr %s211, 8
        %s213 = scalar_lea.vmem [#allocation7], %s212
        %s214 = smul.u32 2, %s22
        %s215 = ssub.s32 3, %s214
        %p216 = scmp.lt.s32.totalorder %s215, 2
        %s217 = scalar_select %p216, %s215, 2
        %s218 = smul.u32 128, %s217
        %s219 = smul.u32 2, %s22
        %s220 = ssub.s32 3, %s219
        %p221 = scmp.lt.s32.totalorder %s220, 2
        %s222 = scalar_select %p221, %s220, 2
        %s223 = smul.u32 128, %s222
        %v224 = vld [vmem:[%s179] sm:$0xff]
        %v225 = vld [vmem:[%s179 + $0x8] sm:$0xff]
        %v226 = vld [vmem:[%s188] sm:$0xff]
        %v227 = vld [vmem:[%s188 + $0x8] sm:$0xff]
        %228 = vmax.xlane.f32.xlu0 %v224
        %v229 = vpop.xlane.xlu0 %228
        %230 = vmax.xlane.f32.xlu0 %v225
        %v231 = vpop.xlane.xlu0 %230
        %v232 = vsub.f32 %v224, %v229
        %v233 = vsub.f32 %v225, %v231
        %v234 = vmul.f32 %v232, 1.442695
        %v235 = vpow.pop %v234
        %v236 = vmul.f32 %v233, 1.442695
        %v237 = vpow.pop %v236
        %238 = vadd.xlane.f32.xlu0 %v235
        %v239 = vpop.xlane.xlu0 %238
        %240 = vadd.xlane.f32.xlu0 %v237
        %v241 = vpop.xlane.xlu0 %240
        %v242 = vlog2.pop %v239
        %v243 = vmul.f32 %v242, 0.6931472
        %v244 = vlog2.pop %v241
        %v245 = vmul.f32 %v244, 0.6931472
        %246 = vmax.xlane.f32.xlu0 %v226
        %v247 = vpop.xlane.xlu0 %246
        %248 = vmax.xlane.f32.xlu0 %v227
        %v249 = vpop.xlane.xlu0 %248
        %v250 = vsub.f32 %v226, %v247
        %v251 = vsub.f32 %v227, %v249
        %v252 = vmul.f32 %v250, 1.442695
        %v253 = vpow.pop %v252
        %v254 = vmul.f32 %v251, 1.442695
        %v255 = vpow.pop %v254
        %256 = vadd.xlane.f32.xlu0 %v253
        %v257 = vpop.xlane.xlu0 %256
        %258 = vadd.xlane.f32.xlu0 %v255
        %v259 = vpop.xlane.xlu0 %258
        %v260 = vrcp.pop %v257
        %v261 = vrcp.pop %v259
        %v262 = vmul.f32 %v253, %v232
        %v263 = vmul.f32 %v255, %v233
        %264 = vadd.xlane.f32.xlu0 %v262
        %v265 = vpop.xlane.xlu0 %264
        %266 = vadd.xlane.f32.xlu0 %v263
        %v267 = vpop.xlane.xlu0 %266
        %v268 = vmul.f32 %v265, %v260
        %v269 = vmul.f32 %v267, %v261
        %v270 = vsub.f32 %v243, %v268
        %v271 = vsub.f32 %v245, %v269
        %v272 = vlaneseq
        %v273 = vshrl.u32 %v272, 7
        %v274 = vadd.s32 %v273, 8
        %s275 = smul.u32 %s22, 16
        %v276 = vstv %s275
        %v277 = vadd.s32 %v273, %v276
        %v278 = vadd.s32 %v274, %v276
        %vm279 = vcmp.lt.s32.totalorder %v277, 20
        %vm280 = vcmp.lt.s32.totalorder %v278, 20
        %v281 = vsel %vm279, %v270, 0.0
        %v282 = vsel %vm280, %v271, 0.0
        %vm283 = vcmask 7168
        %v284 = vsel %vm283, %v281, 0.0
        %v285 = vsel %vm283, %v282, 0.0
        %v286 = vadd.f32 %v284, %v285
        %287 = vadd.xlane.f32.xlu0 %v286
        %v288 = vpop.xlane.xlu0 %287
        %v289 = vrot.slane %v288, 4
        %v290 = vadd.f32 %v288, %v289
        %v291 = vrot.slane %v290, 2
        %v292 = vadd.f32 %v290, %v291
        %v293 = vrot.slane %v292, 1
        %v294 = vadd.f32 %v292, %v293
        %s295 = vtos %v294
        %v296 = vstv %s295
        %v297 = vadd.f32 %v296, 0.0
        %298 = vst [vmem:[%s213] sm:$0xff] %v297
        %s299 = sand.u32 %s82, 1
        %s300 = scalar_lea.sflag [#allocation4], %s299
        %s301 = sand.u32 %s82, 1
        %s302 = smul.addr %s301, 8
        %s303 = scalar_lea.vmem [#allocation7], %s302
        // Predicated region
        $region37: #{tpu_custom_call.1} parent=27 // pred_check
          %p304 = pneg %p92
        $region38: #{tpu_custom_call.1} parent=27 // pred_check_branch
          %306 = sbr.rel (%p304) target = $region40
        $region39: #{tpu_custom_call.1} parent=27 // pred_region
          %s308 = ssub.s32 128, 128
          %309 = vsyncadd %s300, %s308
          %s310 = smul.addr %s22, 128
          %s311 = scalar_lea.hbm %s2, %s310
          %s313 = sshll.u32 %s303, 4
          %s314 = int_to_ptr.vmem [resolvable:$true] %s313
          %316 = dma.vmem_to_hbm [thread:$0]  %s314, 128, %s311, %s300
        $region40: #{tpu_custom_call.1} parent=27 // pred_fallthru
          _
      $region28: #{tpu_custom_call.1} parent=5 // pred_fallthru
        _
      %p317 = scmp.le.s32.totalorder 2, %s17
      // Predicated region
      $region41: #{tpu_custom_call.1} parent=5 // pred_check
        %p318 = pneg %p317
      $region42: #{tpu_custom_call.1} parent=5 // pred_check_branch
        %320 = sbr.rel (%p318) target = $region44
      $region43: #{tpu_custom_call.1} parent=5 // pred_region
        %s321 = ssub.s32 %s17, 2
        // Predicated region
        $region45: #{tpu_custom_call.1} parent=43 // pred_check
          %p322 = pneg %p98
        $region46: #{tpu_custom_call.1} parent=43 // pred_check_branch
          %324 = sbr.rel (%p322) target = $region48
        $region47: #{tpu_custom_call.1} parent=43 // pred_region
          %s325 = sand.u32 %s83, 1
          %s326 = scalar_lea.sflag [#allocation4], %s325
          %s327 = sand.u32 %s83, 1
          %s328 = smul.addr %s327, 8
          %s329 = scalar_lea.vmem [#allocation7], %s328
          %330 = dma.done %s326, 128
        $region48: #{tpu_custom_call.1} parent=43 // pred_fallthru
          _
      $region44: #{tpu_custom_call.1} parent=5 // pred_fallthru
        _
    $region6: #{tpu_custom_call.1} parent=1 // loop_footer
      %s21 = sadd.s32 1, %s17
    $region7: #{tpu_custom_call.1} parent=1 // loop_footer_branch
      %16 = sbr.rel target = $region3
    $region8: #{tpu_custom_call.1} parent=1 // loop_exit
      _
    %331 = vsyncpa [#allocation3], 1
    %s332 = scalar_lea.sflag [#allocation3], 1
    %333 = vsyncpa %s332, 1
    %334 = vsyncpa [#allocation6], 1
    %s335 = scalar_lea.sflag [#allocation6], 1
    %336 = vsyncpa %s335, 1
    %337 = vsyncpa [#allocation4], 1
    %s338 = scalar_lea.sflag [#allocation4], 1
    %339 = vsyncpa %s338, 1

</llo_original>
